<compile_context>
chip_gen: v5e
topology: v5e:2x2
jax: 0.10.0
libtpu: 0.0.40
codegen_flags: <defaults>
</compile_context>

<pallas_src>
import functools

import jax
import jax.numpy as jnp
from jax.experimental import pallas as pl
from jax.experimental.pallas import tpu as pltpu


IN_FEATURES = 1408
OUT_FEATURES = 1000
P_DROP = 0.3

_SUBLANE = 8
_LANE = 128
_TILE_N = 256  # (Kp x 256) f32 weight tile = 1.44 MB; 2x-buffered fits every scoped-VMEM limit


def _round_up(x, m):
    return (x + m - 1) // m * m


def _dropout_linear_kernel(x_ref, bits_ref, wt_ref, b_ref, o_ref, *, p_drop):
    """One N-tile of  y = dropout(x, p) @ W^T + b  (inverted-dropout scaling)."""
    x = x_ref[...]
    if p_drop > 0.0:
        # integer-threshold dropout: keep element iff bits >= p * 2^32
        threshold = jnp.uint32(int(p_drop * (1 << 32)))
        keep = bits_ref[...] >= threshold
        x = jnp.where(keep, x, jnp.float32(0.0))
    y = jnp.dot(x, wt_ref[...], preferred_element_type=jnp.float32)
    if p_drop > 0.0:
        y = y * jnp.float32(1.0 / (1.0 - p_drop))  # scale on the small (Bp, TILE_N) output
    o_ref[...] = y + b_ref[...]  # b_ref is (1, TILE_N) -> broadcasts over batch rows


def prepare_linear_params(weight, bias):
    """Transpose + pad the Linear parameters ONCE (module init), not per call."""
    N, K = weight.shape
    Kp = _round_up(K, _LANE)
    Np = _round_up(N, _TILE_N)  # multiple of the N tile so the grid divides evenly
    wt_p = jnp.zeros((Kp, Np), jnp.float32).at[:K, :N].set(weight.T.astype(jnp.float32))
    b_p = jnp.zeros((1, Np), jnp.float32).at[0, :N].set(bias.astype(jnp.float32))
    return wt_p, b_p


@functools.partial(jax.jit, static_argnames=("n_out", "p_drop", "training"))
def dropout_linear(x, wt_p, b_p, key, *, n_out, p_drop=P_DROP, training=True):
    """x: (B, K) f32; wt_p: (Kp, Np) pre-transposed/padded weight; b_p: (1, Np) bias."""
    B, K = x.shape
    Kp, Np = wt_p.shape
    assert K == Kp, "K must be lane-aligned (1408 % 128 == 0 for this module)"
    p = float(p_drop) if training else 0.0

    Bp = _round_up(max(B, _SUBLANE), _SUBLANE)
    x_p = jnp.pad(x.astype(jnp.float32), ((0, Bp - B), (0, 0)))
    # Deterministic dropout bits from a JAX key (reproducible on CPU-interpret and TPU).
    # TODO(synk): mask will never bit-match PyTorch's RNG; only the distribution matches.
    bits = jax.random.bits(key, (Bp, Kp), dtype=jnp.uint32)

    kernel = functools.partial(_dropout_linear_kernel, p_drop=p)
    grid = (Np // _TILE_N,)

    out_p = pl.pallas_call(
        kernel,
        out_shape=jax.ShapeDtypeStruct((Bp, Np), jnp.float32),
        grid=grid,
        in_specs=[
            pl.BlockSpec((Bp, Kp), lambda j: (0, 0)),        # x (same block across N tiles)
            pl.BlockSpec((Bp, Kp), lambda j: (0, 0)),        # dropout bits
            pl.BlockSpec((Kp, _TILE_N), lambda j: (0, j)),   # W^T tile (streamed / pipelined)
            pl.BlockSpec((1, _TILE_N), lambda j: (0, j)),    # bias tile
        ],
        out_specs=pl.BlockSpec((Bp, _TILE_N), lambda j: (0, j)),
        compiler_params=pltpu.CompilerParams(
            dimension_semantics=("parallel",),  # v7x: shard the weight stream over both TCs
        ),
    )(x_p, bits, wt_p, b_p)

    return out_p[:B, :n_out]


if __name__ == "__main__":
    key = jax.random.PRNGKey(0)
    k_x, k_w, k_b, k_drop = jax.random.split(key, 4)

    # Module input: torch.randn([1, 1408])
    x = jax.random.normal(k_x, (1, IN_FEATURES), dtype=jnp.float32)

    # Deterministic Linear parameters (PyTorch-style uniform init bounds).
    bound = 1.0 / (IN_FEATURES ** 0.5)
    weight = jax.random.uniform(
        k_w, (OUT_FEATURES, IN_FEATURES), minval=-bound, maxval=bound, dtype=jnp.float32
    )
    bias = jax.random.uniform(
        k_b, (OUT_FEATURES,), minval=-bound, maxval=bound, dtype=jnp.float32
    )

    # One-time parameter prep (hoisted out of the per-call hot path).
    wt_p, b_p = prepare_linear_params(weight, bias)

    # ---- Training-mode forward (dropout active) ----
    y_train = dropout_linear(x, wt_p, b_p, k_drop, n_out=OUT_FEATURES, training=True)
    y_train = jax.block_until_ready(y_train)
    assert y_train.shape == (1, OUT_FEATURES)

    # Reference with the identical mask (bits regenerated the same way outside the kernel).
    Bp = _round_up(max(1, _SUBLANE), _SUBLANE)
    bits_ref = jax.random.bits(k_drop, (Bp, IN_FEATURES), dtype=jnp.uint32)
    thr = jnp.uint32(int(P_DROP * (1 << 32)))
    x_masked = jnp.where(bits_ref[:1] >= thr, x, jnp.float32(0.0))
    y_train_ref = (x_masked @ weight.T) * jnp.float32(1.0 / (1.0 - P_DROP)) + bias
    # Tolerance covers MXU default-precision (bf16-pass) f32 matmul on real TPU.
    assert jnp.allclose(y_train, y_train_ref, atol=2e-2, rtol=2e-2)

    # ---- Eval-mode forward (dropout = identity) ----
    y_eval = dropout_linear(x, wt_p, b_p, k_drop, n_out=OUT_FEATURES, training=False)
    y_eval = jax.block_until_ready(y_eval)
    y_ref = x @ weight.T + bias
    assert jnp.allclose(y_eval, y_ref, atol=2e-2, rtol=2e-2)

    print("KERNEL_OK")
</pallas_src>

<mosaic_0001>
module attributes {stable_mosaic.version = 11 : i64} {
  func.func @_dropout_linear_kernel(%arg0: i32, %arg1: memref<8x1408xf32, #tpu.memory_space<vmem>>, %arg2: memref<8x1408xi32, #tpu.memory_space<vmem>>, %arg3: memref<1408x256xf32, #tpu.memory_space<vmem>>, %arg4: memref<1x256xf32, #tpu.memory_space<vmem>>, %arg5: memref<8x256xf32, #tpu.memory_space<vmem>>) attributes {dimension_semantics = [#tpu.dimension_semantics<parallel>], iteration_bounds = array<i64: 4>, scalar_prefetch = 0 : i64, scratch_operands = 0 : i64, tpu.core_type = #tpu.core_type<tc>, window_params = [{pipeline_mode = #tpu.pipeline_mode<synchronous>, transform_indices = @transform_0, window_bounds = array<i64: 8, 1408>}, {pipeline_mode = #tpu.pipeline_mode<synchronous>, transform_indices = @transform_1, window_bounds = array<i64: 8, 1408>}, {transform_indices = @transform_2, window_bounds = array<i64: 1408, 256>}, {transform_indices = @transform_3, window_bounds = array<i64: 1, 256>}, {transform_indices = @transform_4, window_bounds = array<i64: 8, 256>}]} {
    %c0 = arith.constant 0 : index
    %c0_0 = arith.constant 0 : index
    %0 = vector.load %arg1[%c0, %c0_0] : memref<8x1408xf32, #tpu.memory_space<vmem>>, vector<8x1408xf32>
    %c0_1 = arith.constant 0 : index
    %c0_2 = arith.constant 0 : index
    %1 = vector.load %arg2[%c0_1, %c0_2] : memref<8x1408xi32, #tpu.memory_space<vmem>>, vector<8x1408xi32>
    %c1288490188_i32 = arith.constant 1288490188 : i32
    %2 = vector.broadcast %c1288490188_i32 : i32 to vector<8x1408xi32>
    %3 = arith.cmpi uge, %1, %2 : vector<8x1408xi32>
    %cst = arith.constant 0.000000e+00 : f32
    %4 = vector.broadcast %cst : f32 to vector<8x1408xf32>
    %5 = arith.select %3, %0, %4 : vector<8x1408xi1>, vector<8x1408xf32>
    %c0_3 = arith.constant 0 : index
    %c0_4 = arith.constant 0 : index
    %6 = vector.load %arg3[%c0_3, %c0_4] : memref<1408x256xf32, #tpu.memory_space<vmem>>, vector<1408x256xf32>
    %cst_5 = arith.constant dense<0.000000e+00> : vector<8x256xf32>
    %7 = tpu.matmul %5, %6, %cst_5 {dimension_numbers = #tpu.dot_dimension_numbers<[1], [0], [0], [1], [0, 0, 1, 1], [], []>} : vector<8x1408xf32>, vector<1408x256xf32>, vector<8x256xf32> -> vector<8x256xf32>
    %cst_6 = arith.constant 1.42857146 : f32
    %8 = vector.broadcast %cst_6 : f32 to vector<8x256xf32>
    %9 = arith.mulf %7, %8 : vector<8x256xf32>
    %c0_7 = arith.constant 0 : index
    %c0_8 = arith.constant 0 : index
    %10 = vector.load %arg4[%c0_7, %c0_8] : memref<1x256xf32, #tpu.memory_space<vmem>>, vector<1x256xf32>
    %11 = vector.broadcast %10 : vector<1x256xf32> to vector<8x256xf32>
    %12 = arith.addf %9, %11 : vector<8x256xf32>
    %c0_9 = arith.constant 0 : index
    %c0_10 = arith.constant 0 : index
    %13 = vector.load %arg5[%c0_9, %c0_10] : memref<8x256xf32, #tpu.memory_space<vmem>>, vector<8x256xf32>
    tpu.vector_store %arg5[%c0_9, %c0_10], %12 {strides = array<i32>} : memref<8x256xf32, #tpu.memory_space<vmem>>, vector<8x256xf32>,
    return
  }
  func.func @transform_0(%arg0: i32) -> (i32, i32) {
    %c0_i32 = arith.constant 0 : i32
    %c0_i32_0 = arith.constant 0 : i32
    %c0_i32_1 = arith.constant 0 : i32
    return %c0_i32, %c0_i32_0 : i32, i32
  }
  func.func @transform_1(%arg0: i32) -> (i32, i32) {
    %c0_i32 = arith.constant 0 : i32
    %c0_i32_0 = arith.constant 0 : i32
    %c0_i32_1 = arith.constant 0 : i32
    return %c0_i32, %c0_i32_0 : i32, i32
  }
  func.func @transform_2(%arg0: i32) -> (i32, i32) {
    %c0_i32 = arith.constant 0 : i32
    %c0_i32_0 = arith.constant 0 : i32
    return %c0_i32, %arg0 : i32, i32
  }
  func.func @transform_3(%arg0: i32) -> (i32, i32) {
    %c0_i32 = arith.constant 0 : i32
    %c0_i32_0 = arith.constant 0 : i32
    return %c0_i32, %arg0 : i32, i32
  }
  func.func @transform_4(%arg0: i32) -> (i32, i32) {
    %c0_i32 = arith.constant 0 : i32
    %c0_i32_0 = arith.constant 0 : i32
    return %c0_i32, %arg0 : i32, i32
  }
}

</mosaic_0001>

<llo_original>
// kernel: dropout_linear.1
$region0: #{dropout_linear.1}
  #allocation0 [shape = 'u32[]', space=smem, size = 0x4, offset = 0x4, fixed_abs, tag = 'smem constant byte address 0x4 - core index']
  #allocation1 [shape = 'u32[72,128]{1,0:T(1,128)}', space=vmem, size = 0x9000, scoped, tag = 'internal scratch']
  %s0 = inlined_call_operand.vmem [shape: f32[8,1408], index: 0, kind: input, shape index: {}]
  %s1 = inlined_call_operand.vmem [shape: u32[8,1408], index: 1, kind: input, shape index: {}]
  %s2 = inlined_call_operand.hbm [shape: f32[1408,1024], index: 2, kind: input, shape index: {}]
  %s3 = inlined_call_operand.hbm [shape: f32[1,1024], index: 3, kind: input, shape index: {}]
  %s4 = inlined_call_operand.vmem [shape: f32[8,1024], index: 4, kind: output, shape index: {}]
  %s5 = sld [smem:[#allocation0]]
  $region57: #{dropout_linear.1} parent=0
    _
  %s7 = ssub.s32 1, %s5
  %s8 = scalar_select 0, %s7, %s5
  $region1: #{dropout_linear.1} parent=0
    #allocation2 [shape = 'u8[2883584]{0}', space=vmem, size = 0x2c0000, scoped, tag = 'input window, operand 2']
    #allocation3 [shape = 's32[2]{0}', space=sflag, size = 0x8, scoped, tag = 'scoped memory for dropout_linear.1']
    #allocation4 [shape = 'u8[2048]{0}', space=vmem, size = 0x800, scoped, tag = 'input window, operand 3']
    #allocation5 [shape = 's32[2]{0}', space=sflag, size = 0x8, scoped, tag = 'scoped memory for dropout_linear.1']
    %9 = vsyncpa [#allocation3], 0
    %s10 = scalar_lea.sflag [#allocation3], 1
    %11 = vsyncpa %s10, 0
    %12 = vsyncpa [#allocation5], 0
    %s13 = scalar_lea.sflag [#allocation5], 1
    %14 = vsyncpa %s13, 0
    loop: start=0, step=1, limit=6
    $region2: #{dropout_linear.1} parent=1 // loop_pre_header
      _
    $region3: #{dropout_linear.1} parent=1 // loop_header
      %s16 = sphi 0, %s20
      %p17 = scmp.ge.s32.totalorder %s16, 6
      %s24 = sphi 0, %s24
      %s26 = sphi 0, %s24
      %s27 = sphi 0, %s26
      %s41 = sphi 0, %s27
      %s45 = sphi 0, %s45
      %s47 = sphi 0, %s45
      %s48 = sphi 0, %s47
      %s62 = sphi 0, %s48
      %s68 = sphi 0, %s70
      %s71 = sphi 0, %s68
      %s72 = sphi 0, %s71
      %s88 = sphi 0, %s72
      %s94 = sphi 0, %s96
      %s97 = sphi 0, %s94
      %s98 = sphi 0, %s97
      %s114 = sphi 0, %s98
      %s120 = sphi 0, %s122
      %s123 = sphi 0, %s120
      %s124 = sphi 0, %s123
      %s140 = sphi 0, %s124
    $region4: #{dropout_linear.1} parent=1 // loop_header_branch
      %19 = sbr.rel (%p17) target = $region8
    $region5: #{dropout_linear.1} parent=1 // loop_body
      %s21 = ssub.s32 %s16, 1
      %s22 = ssub.s32 %s16, 2
      %s23 = sadd.s32 %s16, 1
      %s25 = sadd.s32 %s24, 1
      %p28 = scmp.eq.s32.totalorder %s16, 3
      %p29 = scmp.ne.s32.totalorder %s24, %s26
      %p30 = scmp.eq.s32.totalorder %s16, 0
      %p31 = por %p29, %p30
      %p32 = scmp.ne.s32.totalorder %s24, %s26
      %p33 = scmp.eq.s32.totalorder %s21, 3
      %p34 = por %p32, %p33
      %p35 = scmp.ne.s32.totalorder %s26, %s27
      %p36 = scmp.eq.s32.totalorder %s21, 0
      %p37 = por %p35, %p36
      %p38 = scmp.ne.s32.totalorder %s26, %s27
      %p39 = scmp.eq.s32.totalorder %s22, 3
      %p40 = por %p38, %p39
      %p42 = scmp.ne.s32.totalorder %s27, %s41
      %p43 = scmp.eq.s32.totalorder %s22, 0
      %p44 = por %p42, %p43
      %s46 = sadd.s32 %s45, 1
      %p49 = scmp.eq.s32.totalorder %s16, 3
      %p50 = scmp.ne.s32.totalorder %s45, %s47
      %p51 = scmp.eq.s32.totalorder %s16, 0
      %p52 = por %p50, %p51
      %p53 = scmp.ne.s32.totalorder %s45, %s47
      %p54 = scmp.eq.s32.totalorder %s21, 3
      %p55 = por %p53, %p54
      %p56 = scmp.ne.s32.totalorder %s47, %s48
      %p57 = scmp.eq.s32.totalorder %s21, 0
      %p58 = por %p56, %p57
      %p59 = scmp.ne.s32.totalorder %s47, %s48
      %p60 = scmp.eq.s32.totalorder %s22, 3
      %p61 = por %p59, %p60
      %p63 = scmp.ne.s32.totalorder %s48, %s62
      %p64 = scmp.eq.s32.totalorder %s22, 0
      %p65 = por %p63, %p64
      %s66 = ssub.s32 %s16, %s23
      %p67 = scmp.eq.s32.totalorder %s66, 0
      %s69 = sadd.s32 %s68, 1
      %s70 = scalar_select %p67, %s68, %s69
      %p73 = pneg %p67
      %p74 = scmp.eq.s32.totalorder %s16, 3
      %p75 = por %p73, %p74
      %p76 = scmp.ne.s32.totalorder %s68, %s71
      %p77 = scmp.eq.s32.totalorder %s16, 0
      %p78 = por %p76, %p77
      %p79 = scmp.ne.s32.totalorder %s68, %s71
      %p80 = scmp.eq.s32.totalorder %s21, 3
      %p81 = por %p79, %p80
      %p82 = scmp.ne.s32.totalorder %s71, %s72
      %p83 = scmp.eq.s32.totalorder %s21, 0
      %p84 = por %p82, %p83
      %p85 = scmp.ne.s32.totalorder %s71, %s72
      %p86 = scmp.eq.s32.totalorder %s22, 3
      %p87 = por %p85, %p86
      %p89 = scmp.ne.s32.totalorder %s72, %s88
      %p90 = scmp.eq.s32.totalorder %s22, 0
      %p91 = por %p89, %p90
      %s92 = ssub.s32 %s16, %s23
      %p93 = scmp.eq.s32.totalorder %s92, 0
      %s95 = sadd.s32 %s94, 1
      %s96 = scalar_select %p93, %s94, %s95
      %p99 = pneg %p93
      %p100 = scmp.eq.s32.totalorder %s16, 3
      %p101 = por %p99, %p100
      %p102 = scmp.ne.s32.totalorder %s94, %s97
      %p103 = scmp.eq.s32.totalorder %s16, 0
      %p104 = por %p102, %p103
      %p105 = scmp.ne.s32.totalorder %s94, %s97
      %p106 = scmp.eq.s32.totalorder %s21, 3
      %p107 = por %p105, %p106
      %p108 = scmp.ne.s32.totalorder %s97, %s98
      %p109 = scmp.eq.s32.totalorder %s21, 0
      %p110 = por %p108, %p109
      %p111 = scmp.ne.s32.totalorder %s97, %s98
      %p112 = scmp.eq.s32.totalorder %s22, 3
      %p113 = por %p111, %p112
      %p115 = scmp.ne.s32.totalorder %s98, %s114
      %p116 = scmp.eq.s32.totalorder %s22, 0
      %p117 = por %p115, %p116
      %s118 = ssub.s32 %s16, %s23
      %p119 = scmp.eq.s32.totalorder %s118, 0
      %s121 = sadd.s32 %s120, 1
      %s122 = scalar_select %p119, %s120, %s121
      %p125 = pneg %p119
      %p126 = scmp.eq.s32.totalorder %s16, 3
      %p127 = por %p125, %p126
      %p128 = scmp.ne.s32.totalorder %s120, %s123
      %p129 = scmp.eq.s32.totalorder %s16, 0
      %p130 = por %p128, %p129
      %p131 = scmp.ne.s32.totalorder %s120, %s123
      %p132 = scmp.eq.s32.totalorder %s21, 3
      %p133 = por %p131, %p132
      %p134 = scmp.ne.s32.totalorder %s123, %s124
      %p135 = scmp.eq.s32.totalorder %s21, 0
      %p136 = por %p134, %p135
      %p137 = scmp.ne.s32.totalorder %s123, %s124
      %p138 = scmp.eq.s32.totalorder %s22, 3
      %p139 = por %p137, %p138
      %p141 = scmp.ne.s32.totalorder %s124, %s140
      %p142 = scmp.eq.s32.totalorder %s22, 0
      %p143 = por %p141, %p142
      %p144 = scmp.le.s32.totalorder 1, %s16
      %p145 = scmp.lt.s32.totalorder %s16, 5
      %p146 = pnand %p144, %p145
      %p147 = pneg %p146
      // Predicated region
      $region9: #{dropout_linear.1} parent=5 // pred_check
        _
      $region10: #{dropout_linear.1} parent=5 // pred_check_branch
        %149 = sbr.rel (%p146) target = $region12
      $region11: #{dropout_linear.1} parent=5 // pred_region
        %s150 = ssub.s32 %s16, 1
        // Predicated region
        $region13: #{dropout_linear.1} parent=11 // pred_check
          %p151 = pneg %p37
        $region14: #{dropout_linear.1} parent=11 // pred_check_branch
          %153 = sbr.rel (%p151) target = $region16
        $region15: #{dropout_linear.1} parent=11 // pred_region
          _
        $region16: #{dropout_linear.1} parent=11 // pred_fallthru
          _
        // Predicated region
        $region17: #{dropout_linear.1} parent=11 // pred_check
          %p154 = pneg %p58
        $region18: #{dropout_linear.1} parent=11 // pred_check_branch
          %156 = sbr.rel (%p154) target = $region20
        $region19: #{dropout_linear.1} parent=11 // pred_region
          _
        $region20: #{dropout_linear.1} parent=11 // pred_fallthru
          _
      $region12: #{dropout_linear.1} parent=5 // pred_fallthru
        _
      %p157 = scmp.lt.s32.totalorder %s16, 4
      // Predicated region
      $region21: #{dropout_linear.1} parent=5 // pred_check
        %p158 = pneg %p157
      $region22: #{dropout_linear.1} parent=5 // pred_check_branch
        %160 = sbr.rel (%p158) target = $region24
      $region23: #{dropout_linear.1} parent=5 // pred_region
        // Predicated region
        $region25: #{dropout_linear.1} parent=23 // pred_check
          %p161 = pneg %p78
        $region26: #{dropout_linear.1} parent=23 // pred_check_branch
          %163 = sbr.rel (%p161) target = $region28
        $region27: #{dropout_linear.1} parent=23 // pred_region
          %s164 = sand.u32 %s68, 1
          %s165 = scalar_lea.sflag [#allocation3], %s164
          %s166 = sand.u32 %s68, 1
          %s167 = smul.addr %s166, 2816
          %s168 = scalar_lea.vmem [#allocation2], %s167
          %s169 = smul.u32 2, %s16
          %171 = vsyncadd %s165, 0
          %s172 = smul.addr %s169, 8
          %s173 = scalar_lea.hbm %s2, %s172
          %s174 = sshll.u32 %s173, 4
          %s175 = int_to_ptr.hbm [resolvable:$true] %s174
          %s176 = sshll.u32 %s168, 4
          %s177 = int_to_ptr.vmem [resolvable:$true] %s176
          %182 = dma.hbm_to_vmem [thread:$0]  %s175, 45056, %s177, %s165, 1024, 256, 16
        $region28: #{dropout_linear.1} parent=23 // pred_fallthru
          _
        // Predicated region
        $region29: #{dropout_linear.1} parent=23 // pred_check
          %p183 = pneg %p104
        $region30: #{dropout_linear.1} parent=23 // pred_check_branch
          %185 = sbr.rel (%p183) target = $region32
        $region31: #{dropout_linear.1} parent=23 // pred_region
          %s186 = sand.u32 %s94, 1
          %s187 = scalar_lea.sflag [#allocation5], %s186
          %s188 = sand.u32 %s94, 1
          %s189 = smul.addr %s188, 2
          %s190 = scalar_lea.vmem [#allocation4], %s189
          %s191 = smul.u32 2, %s16
          %193 = vsyncadd %s187, 0
          %s194 = scalar_lea.hbm %s3, %s191
          %s196 = sshll.u32 %s194, 4
          %s197 = int_to_ptr.hbm [resolvable:$true] %s196
          %s198 = sshll.u32 %s190, 4
          %s199 = int_to_ptr.vmem [resolvable:$true] %s198
          %201 = dma.hbm_to_vmem [thread:$0]  %s197, 32, %s199, %s187
        $region32: #{dropout_linear.1} parent=23 // pred_fallthru
          _
      $region24: #{dropout_linear.1} parent=5 // pred_fallthru
        _
      %p202 = scmp.le.s32.totalorder 1, %s16
      %p203 = scmp.lt.s32.totalorder %s16, 5
      %p204 = pnand %p202, %p203
      %p205 = pneg %p204
      // Predicated region
      $region33: #{dropout_linear.1} parent=5 // pred_check
        _
      $region34: #{dropout_linear.1} parent=5 // pred_check_branch
        %207 = sbr.rel (%p204) target = $region36
      $region35: #{dropout_linear.1} parent=5 // pred_region
        %s208 = ssub.s32 %s16, 1
        %s209 = sand.u32 %s71, 1
        %s210 = scalar_lea.sflag [#allocation3], %s209
        %s211 = sand.u32 %s71, 1
        %s212 = smul.addr %s211, 2816
        %s213 = scalar_lea.vmem [#allocation2], %s212
        // Predicated region
        $region37: #{dropout_linear.1} parent=35 // pred_check
          %p214 = pneg %p84
        $region38: #{dropout_linear.1} parent=35 // pred_check_branch
          %216 = sbr.rel (%p214) target = $region40
        $region39: #{dropout_linear.1} parent=35 // pred_region
          %218 = dma.done %s210, 45056
        $region40: #{dropout_linear.1} parent=35 // pred_fallthru
          _
        %s219 = sand.u32 %s97, 1
        %s220 = scalar_lea.sflag [#allocation5], %s219
        %s221 = sand.u32 %s97, 1
        %s222 = smul.addr %s221, 2
        %s223 = scalar_lea.vmem [#allocation4], %s222
        // Predicated region
        $region41: #{dropout_linear.1} parent=35 // pred_check
          %p224 = pneg %p110
        $region42: #{dropout_linear.1} parent=35 // pred_check_branch
          %226 = sbr.rel (%p224) target = $region44
        $region43: #{dropout_linear.1} parent=35 // pred_region
          %228 = dma.done %s220, 32
        $region44: #{dropout_linear.1} parent=35 // pred_fallthru
          _
        %p229 = pneg %p37
        %p230 = pneg %p34
        %p231 = pneg %p58
        %p232 = pneg %p55
        %s233 = sand.u32 %s71, 1
        %s234 = scalar_lea.sflag [#allocation3], %s233
        %s235 = sand.u32 %s71, 1
        %s236 = smul.addr %s235, 2816
        %s237 = scalar_lea.vmem [#allocation2], %s236
        %p238 = pneg %p84
        %p239 = pneg %p81
        %s240 = sand.u32 %s97, 1
        %s241 = scalar_lea.sflag [#allocation5], %s240
        %s242 = sand.u32 %s97, 1
        %s243 = smul.addr %s242, 2
        %s244 = scalar_lea.vmem [#allocation4], %s243
        %p245 = pneg %p110
        %p246 = pneg %p107
        %p247 = pneg %p136
        %p248 = pneg %p133
        %s249 = smul.u32 2, %s21
        %p250 = scmp.lt.s32.totalorder %s249, 7
        %s251 = scalar_select %p250, %s249, 7
        %s252 = smul.addr %s251, 8
        %s253 = scalar_lea.vmem %s4, %s252
        %s254 = smul.u32 2, %s21
        %s255 = smul.u32 2, %s21
        %s256 = smul.u32 2, %s21
        %p257 = scmp.lt.s32.totalorder %s256, 7
        %s258 = scalar_select %p257, %s256, 7
        %s259 = smul.addr %s258, 8
        %s260 = scalar_lea.vmem %s4, %s259
        %s261 = smul.u32 2, %s21
        %v262 = vld [vmem:[%s0] sm:$0xff]
        %v263 = vld [vmem:[%s0 + $0x8] sm:$0xff]
        %v264 = vld [vmem:[%s0 + $0x10] sm:$0xff]
        %v265 = vld [vmem:[%s0 + $0x18] sm:$0xff]
        %v266 = vld [vmem:[%s0 + $0x20] sm:$0xff]
        %v267 = vld [vmem:[%s0 + $0x28] sm:$0xff]
        %v268 = vld [vmem:[%s0 + $0x30] sm:$0xff]
        %v269 = vld [vmem:[%s0 + $0x38] sm:$0xff]
        %v270 = vld [vmem:[%s0 + $0x40] sm:$0xff]
        %v271 = vld [vmem:[%s0 + $0x48] sm:$0xff]
        %v272 = vld [vmem:[%s0 + $0x50] sm:$0xff]
        %v273 = vld [vmem:[%s1] sm:$0xff]
        %v274 = vld [vmem:[%s1 + $0x8] sm:$0xff]
        %v275 = vld [vmem:[%s1 + $0x10] sm:$0xff]
        %v276 = vld [vmem:[%s1 + $0x18] sm:$0xff]
        %v277 = vld [vmem:[%s1 + $0x20] sm:$0xff]
        %v278 = vld [vmem:[%s1 + $0x28] sm:$0xff]
        %v279 = vld [vmem:[%s1 + $0x30] sm:$0xff]
        %v280 = vld [vmem:[%s1 + $0x38] sm:$0xff]
        %v281 = vld [vmem:[%s1 + $0x40] sm:$0xff]
        %v282 = vld [vmem:[%s1 + $0x48] sm:$0xff]
        %v283 = vld [vmem:[%s1 + $0x50] sm:$0xff]
        %v284 = vadd.s32 %v273, 2147483648
        %vm286 = vcmp.ge.s32.totalorder %v284, 3435973836
        %v287 = vadd.s32 %v274, 2147483648
        %vm289 = vcmp.ge.s32.totalorder %v287, 3435973836
        %v290 = vadd.s32 %v275, 2147483648
        %vm292 = vcmp.ge.s32.totalorder %v290, 3435973836
        %v293 = vadd.s32 %v276, 2147483648
        %vm295 = vcmp.ge.s32.totalorder %v293, 3435973836
        %v296 = vadd.s32 %v277, 2147483648
        %vm298 = vcmp.ge.s32.totalorder %v296, 3435973836
        %v299 = vadd.s32 %v278, 2147483648
        %vm301 = vcmp.ge.s32.totalorder %v299, 3435973836
        %v302 = vadd.s32 %v279, 2147483648
        %vm304 = vcmp.ge.s32.totalorder %v302, 3435973836
        %v305 = vadd.s32 %v280, 2147483648
        %vm307 = vcmp.ge.s32.totalorder %v305, 3435973836
        %v308 = vadd.s32 %v281, 2147483648
        %vm310 = vcmp.ge.s32.totalorder %v308, 3435973836
        %v311 = vadd.s32 %v282, 2147483648
        %vm313 = vcmp.ge.s32.totalorder %v311, 3435973836
        %v314 = vadd.s32 %v283, 2147483648
        %vm316 = vcmp.ge.s32.totalorder %v314, 3435973836
        %v317 = vsel %vm286, %v262, 0.0
        %v318 = vsel %vm289, %v263, 0.0
        %v319 = vsel %vm292, %v264, 0.0
        %v320 = vsel %vm295, %v265, 0.0
        %v321 = vsel %vm298, %v266, 0.0
        %v322 = vsel %vm301, %v267, 0.0
        %v323 = vsel %vm304, %v268, 0.0
        %v324 = vsel %vm307, %v269, 0.0
        %v325 = vsel %vm310, %v270, 0.0
        %v326 = vsel %vm313, %v271, 0.0
        %v327 = vsel %vm316, %v272, 0.0
        %v328 = vld [vmem:[%s213] sm:$0xff]
        %v329 = vld [vmem:[%s213 + $0x8] sm:$0xff]
        %v330 = vld [vmem:[%s213 + $0x10] sm:$0xff]
        %v331 = vld [vmem:[%s213 + $0x18] sm:$0xff]
        %v332 = vld [vmem:[%s213 + $0x20] sm:$0xff]
        %v333 = vld [vmem:[%s213 + $0x28] sm:$0xff]
        %v334 = vld [vmem:[%s213 + $0x30] sm:$0xff]
        %v335 = vld [vmem:[%s213 + $0x38] sm:$0xff]
        %v336 = vld [vmem:[%s213 + $0x40] sm:$0xff]
        %v337 = vld [vmem:[%s213 + $0x48] sm:$0xff]
        %v338 = vld [vmem:[%s213 + $0x50] sm:$0xff]
        %v339 = vld [vmem:[%s213 + $0x58] sm:$0xff]
        %v340 = vld [vmem:[%s213 + $0x60] sm:$0xff]
        %v341 = vld [vmem:[%s213 + $0x68] sm:$0xff]
        %v342 = vld [vmem:[%s213 + $0x70] sm:$0xff]
        %v343 = vld [vmem:[%s213 + $0x78] sm:$0xff]
        %v344 = vld [vmem:[%s213 + $0x80] sm:$0xff]
        %v345 = vld [vmem:[%s213 + $0x88] sm:$0xff]
        %v346 = vld [vmem:[%s213 + $0x90] sm:$0xff]
        %v347 = vld [vmem:[%s213 + $0x98] sm:$0xff]
        %v348 = vld [vmem:[%s213 + $0xa0] sm:$0xff]
        %v349 = vld [vmem:[%s213 + $0xa8] sm:$0xff]
        %v350 = vld [vmem:[%s213 + $0xb0] sm:$0xff]
        %v351 = vld [vmem:[%s213 + $0xb8] sm:$0xff]
        %v352 = vld [vmem:[%s213 + $0xc0] sm:$0xff]
        %v353 = vld [vmem:[%s213 + $0xc8] sm:$0xff]
        %v354 = vld [vmem:[%s213 + $0xd0] sm:$0xff]
        %v355 = vld [vmem:[%s213 + $0xd8] sm:$0xff]
        %v356 = vld [vmem:[%s213 + $0xe0] sm:$0xff]
        %v357 = vld [vmem:[%s213 + $0xe8] sm:$0xff]
        %v358 = vld [vmem:[%s213 + $0xf0] sm:$0xff]
        %v359 = vld [vmem:[%s213 + $0xf8] sm:$0xff]
        %v360 = vld [vmem:[%s213 + $0x100] sm:$0xff]
        %v361 = vld [vmem:[%s213 + $0x108] sm:$0xff]
        %v362 = vld [vmem:[%s213 + $0x110] sm:$0xff]
        %v363 = vld [vmem:[%s213 + $0x118] sm:$0xff]
        %v364 = vld [vmem:[%s213 + $0x120] sm:$0xff]
        %v365 = vld [vmem:[%s213 + $0x128] sm:$0xff]
        %v366 = vld [vmem:[%s213 + $0x130] sm:$0xff]
        %v367 = vld [vmem:[%s213 + $0x138] sm:$0xff]
        %v368 = vld [vmem:[%s213 + $0x140] sm:$0xff]
        %v369 = vld [vmem:[%s213 + $0x148] sm:$0xff]
        %v370 = vld [vmem:[%s213 + $0x150] sm:$0xff]
        %v371 = vld [vmem:[%s213 + $0x158] sm:$0xff]
        %v372 = vld [vmem:[%s213 + $0x160] sm:$0xff]
        %v373 = vld [vmem:[%s213 + $0x168] sm:$0xff]
        %v374 = vld [vmem:[%s213 + $0x170] sm:$0xff]
        %v375 = vld [vmem:[%s213 + $0x178] sm:$0xff]
        %v376 = vld [vmem:[%s213 + $0x180] sm:$0xff]
        %v377 = vld [vmem:[%s213 + $0x188] sm:$0xff]
        %v378 = vld [vmem:[%s213 + $0x190] sm:$0xff]
        %v379 = vld [vmem:[%s213 + $0x198] sm:$0xff]
        %v380 = vld [vmem:[%s213 + $0x1a0] sm:$0xff]
        %v381 = vld [vmem:[%s213 + $0x1a8] sm:$0xff]
        %v382 = vld [vmem:[%s213 + $0x1b0] sm:$0xff]
        %v383 = vld [vmem:[%s213 + $0x1b8] sm:$0xff]
        %v384 = vld [vmem:[%s213 + $0x1c0] sm:$0xff]
        %v385 = vld [vmem:[%s213 + $0x1c8] sm:$0xff]
        %v386 = vld [vmem:[%s213 + $0x1d0] sm:$0xff]
        %v387 = vld [vmem:[%s213 + $0x1d8] sm:$0xff]
        %v388 = vld [vmem:[%s213 + $0x1e0] sm:$0xff]
        %v389 = vld [vmem:[%s213 + $0x1e8] sm:$0xff]
        %v390 = vld [vmem:[%s213 + $0x1f0] sm:$0xff]
        %v391 = vld [vmem:[%s213 + $0x1f8] sm:$0xff]
        %v392 = vld [vmem:[%s213 + $0x200] sm:$0xff]
        %v393 = vld [vmem:[%s213 + $0x208] sm:$0xff]
        %v394 = vld [vmem:[%s213 + $0x210] sm:$0xff]
        %v395 = vld [vmem:[%s213 + $0x218] sm:$0xff]
        %v396 = vld [vmem:[%s213 + $0x220] sm:$0xff]
        %v397 = vld [vmem:[%s213 + $0x228] sm:$0xff]
        %v398 = vld [vmem:[%s213 + $0x230] sm:$0xff]
        %v399 = vld [vmem:[%s213 + $0x238] sm:$0xff]
        %v400 = vld [vmem:[%s213 + $0x240] sm:$0xff]
        %v401 = vld [vmem:[%s213 + $0x248] sm:$0xff]
        %v402 = vld [vmem:[%s213 + $0x250] sm:$0xff]
        %v403 = vld [vmem:[%s213 + $0x258] sm:$0xff]
        %v404 = vld [vmem:[%s213 + $0x260] sm:$0xff]
        %v405 = vld [vmem:[%s213 + $0x268] sm:$0xff]
        %v406 = vld [vmem:[%s213 + $0x270] sm:$0xff]
        %v407 = vld [vmem:[%s213 + $0x278] sm:$0xff]
        %v408 = vld [vmem:[%s213 + $0x280] sm:$0xff]
        %v409 = vld [vmem:[%s213 + $0x288] sm:$0xff]
        %v410 = vld [vmem:[%s213 + $0x290] sm:$0xff]
        %v411 = vld [vmem:[%s213 + $0x298] sm:$0xff]
        %v412 = vld [vmem:[%s213 + $0x2a0] sm:$0xff]
        %v413 = vld [vmem:[%s213 + $0x2a8] sm:$0xff]
        %v414 = vld [vmem:[%s213 + $0x2b0] sm:$0xff]
        %v415 = vld [vmem:[%s213 + $0x2b8] sm:$0xff]
        %v416 = vld [vmem:[%s213 + $0x2c0] sm:$0xff]
        %v417 = vld [vmem:[%s213 + $0x2c8] sm:$0xff]
        %v418 = vld [vmem:[%s213 + $0x2d0] sm:$0xff]
        %v419 = vld [vmem:[%s213 + $0x2d8] sm:$0xff]
        %v420 = vld [vmem:[%s213 + $0x2e0] sm:$0xff]
        %v421 = vld [vmem:[%s213 + $0x2e8] sm:$0xff]
        %v422 = vld [vmem:[%s213 + $0x2f0] sm:$0xff]
        %v423 = vld [vmem:[%s213 + $0x2f8] sm:$0xff]
        %v424 = vld [vmem:[%s213 + $0x300] sm:$0xff]
        %v425 = vld [vmem:[%s213 + $0x308] sm:$0xff]
        %v426 = vld [vmem:[%s213 + $0x310] sm:$0xff]
        %v427 = vld [vmem:[%s213 + $0x318] sm:$0xff]
        %v428 = vld [vmem:[%s213 + $0x320] sm:$0xff]
        %v429 = vld [vmem:[%s213 + $0x328] sm:$0xff]
        %v430 = vld [vmem:[%s213 + $0x330] sm:$0xff]
        %v431 = vld [vmem:[%s213 + $0x338] sm:$0xff]
        %v432 = vld [vmem:[%s213 + $0x340] sm:$0xff]
        %v433 = vld [vmem:[%s213 + $0x348] sm:$0xff]
        %v434 = vld [vmem:[%s213 + $0x350] sm:$0xff]
        %v435 = vld [vmem:[%s213 + $0x358] sm:$0xff]
        %v436 = vld [vmem:[%s213 + $0x360] sm:$0xff]
        %v437 = vld [vmem:[%s213 + $0x368] sm:$0xff]
        %v438 = vld [vmem:[%s213 + $0x370] sm:$0xff]
        %v439 = vld [vmem:[%s213 + $0x378] sm:$0xff]
        %v440 = vld [vmem:[%s213 + $0x380] sm:$0xff]
        %v441 = vld [vmem:[%s213 + $0x388] sm:$0xff]
        %v442 = vld [vmem:[%s213 + $0x390] sm:$0xff]
        %v443 = vld [vmem:[%s213 + $0x398] sm:$0xff]
        %v444 = vld [vmem:[%s213 + $0x3a0] sm:$0xff]
        %v445 = vld [vmem:[%s213 + $0x3a8] sm:$0xff]
        %v446 = vld [vmem:[%s213 + $0x3b0] sm:$0xff]
        %v447 = vld [vmem:[%s213 + $0x3b8] sm:$0xff]
        %v448 = vld [vmem:[%s213 + $0x3c0] sm:$0xff]
        %v449 = vld [vmem:[%s213 + $0x3c8] sm:$0xff]
        %v450 = vld [vmem:[%s213 + $0x3d0] sm:$0xff]
        %v451 = vld [vmem:[%s213 + $0x3d8] sm:$0xff]
        %v452 = vld [vmem:[%s213 + $0x3e0] sm:$0xff]
        %v453 = vld [vmem:[%s213 + $0x3e8] sm:$0xff]
        %v454 = vld [vmem:[%s213 + $0x3f0] sm:$0xff]
        %v455 = vld [vmem:[%s213 + $0x3f8] sm:$0xff]
        %v456 = vld [vmem:[%s213 + $0x400] sm:$0xff]
        %v457 = vld [vmem:[%s213 + $0x408] sm:$0xff]
        %v458 = vld [vmem:[%s213 + $0x410] sm:$0xff]
        %v459 = vld [vmem:[%s213 + $0x418] sm:$0xff]
        %v460 = vld [vmem:[%s213 + $0x420] sm:$0xff]
        %v461 = vld [vmem:[%s213 + $0x428] sm:$0xff]
        %v462 = vld [vmem:[%s213 + $0x430] sm:$0xff]
        %v463 = vld [vmem:[%s213 + $0x438] sm:$0xff]
        %v464 = vld [vmem:[%s213 + $0x440] sm:$0xff]
        %v465 = vld [vmem:[%s213 + $0x448] sm:$0xff]
        %v466 = vld [vmem:[%s213 + $0x450] sm:$0xff]
        %v467 = vld [vmem:[%s213 + $0x458] sm:$0xff]
        %v468 = vld [vmem:[%s213 + $0x460] sm:$0xff]
        %v469 = vld [vmem:[%s213 + $0x468] sm:$0xff]
        %v470 = vld [vmem:[%s213 + $0x470] sm:$0xff]
        %v471 = vld [vmem:[%s213 + $0x478] sm:$0xff]
        %v472 = vld [vmem:[%s213 + $0x480] sm:$0xff]
        %v473 = vld [vmem:[%s213 + $0x488] sm:$0xff]
        %v474 = vld [vmem:[%s213 + $0x490] sm:$0xff]
        %v475 = vld [vmem:[%s213 + $0x498] sm:$0xff]
        %v476 = vld [vmem:[%s213 + $0x4a0] sm:$0xff]
        %v477 = vld [vmem:[%s213 + $0x4a8] sm:$0xff]
        %v478 = vld [vmem:[%s213 + $0x4b0] sm:$0xff]
        %v479 = vld [vmem:[%s213 + $0x4b8] sm:$0xff]
        %v480 = vld [vmem:[%s213 + $0x4c0] sm:$0xff]
        %v481 = vld [vmem:[%s213 + $0x4c8] sm:$0xff]
        %v482 = vld [vmem:[%s213 + $0x4d0] sm:$0xff]
        %v483 = vld [vmem:[%s213 + $0x4d8] sm:$0xff]
        %v484 = vld [vmem:[%s213 + $0x4e0] sm:$0xff]
        %v485 = vld [vmem:[%s213 + $0x4e8] sm:$0xff]
        %v486 = vld [vmem:[%s213 + $0x4f0] sm:$0xff]
        %v487 = vld [vmem:[%s213 + $0x4f8] sm:$0xff]
        %v488 = vld [vmem:[%s213 + $0x500] sm:$0xff]
        %v489 = vld [vmem:[%s213 + $0x508] sm:$0xff]
        %v490 = vld [vmem:[%s213 + $0x510] sm:$0xff]
        %v491 = vld [vmem:[%s213 + $0x518] sm:$0xff]
        %v492 = vld [vmem:[%s213 + $0x520] sm:$0xff]
        %v493 = vld [vmem:[%s213 + $0x528] sm:$0xff]
        %v494 = vld [vmem:[%s213 + $0x530] sm:$0xff]
        %v495 = vld [vmem:[%s213 + $0x538] sm:$0xff]
        %v496 = vld [vmem:[%s213 + $0x540] sm:$0xff]
        %v497 = vld [vmem:[%s213 + $0x548] sm:$0xff]
        %v498 = vld [vmem:[%s213 + $0x550] sm:$0xff]
        %v499 = vld [vmem:[%s213 + $0x558] sm:$0xff]
        %v500 = vld [vmem:[%s213 + $0x560] sm:$0xff]
        %v501 = vld [vmem:[%s213 + $0x568] sm:$0xff]
        %v502 = vld [vmem:[%s213 + $0x570] sm:$0xff]
        %v503 = vld [vmem:[%s213 + $0x578] sm:$0xff]
        %v504 = vld [vmem:[%s213 + $0x580] sm:$0xff]
        %v505 = vld [vmem:[%s213 + $0x588] sm:$0xff]
        %v506 = vld [vmem:[%s213 + $0x590] sm:$0xff]
        %v507 = vld [vmem:[%s213 + $0x598] sm:$0xff]
        %v508 = vld [vmem:[%s213 + $0x5a0] sm:$0xff]
        %v509 = vld [vmem:[%s213 + $0x5a8] sm:$0xff]
        %v510 = vld [vmem:[%s213 + $0x5b0] sm:$0xff]
        %v511 = vld [vmem:[%s213 + $0x5b8] sm:$0xff]
        %v512 = vld [vmem:[%s213 + $0x5c0] sm:$0xff]
        %v513 = vld [vmem:[%s213 + $0x5c8] sm:$0xff]
        %v514 = vld [vmem:[%s213 + $0x5d0] sm:$0xff]
        %v515 = vld [vmem:[%s213 + $0x5d8] sm:$0xff]
        %v516 = vld [vmem:[%s213 + $0x5e0] sm:$0xff]
        %v517 = vld [vmem:[%s213 + $0x5e8] sm:$0xff]
        %v518 = vld [vmem:[%s213 + $0x5f0] sm:$0xff]
        %v519 = vld [vmem:[%s213 + $0x5f8] sm:$0xff]
        %v520 = vld [vmem:[%s213 + $0x600] sm:$0xff]
        %v521 = vld [vmem:[%s213 + $0x608] sm:$0xff]
        %v522 = vld [vmem:[%s213 + $0x610] sm:$0xff]
        %v523 = vld [vmem:[%s213 + $0x618] sm:$0xff]
        %v524 = vld [vmem:[%s213 + $0x620] sm:$0xff]
        %v525 = vld [vmem:[%s213 + $0x628] sm:$0xff]
        %v526 = vld [vmem:[%s213 + $0x630] sm:$0xff]
        %v527 = vld [vmem:[%s213 + $0x638] sm:$0xff]
        %v528 = vld [vmem:[%s213 + $0x640] sm:$0xff]
        %v529 = vld [vmem:[%s213 + $0x648] sm:$0xff]
        %v530 = vld [vmem:[%s213 + $0x650] sm:$0xff]
        %v531 = vld [vmem:[%s213 + $0x658] sm:$0xff]
        %v532 = vld [vmem:[%s213 + $0x660] sm:$0xff]
        %v533 = vld [vmem:[%s213 + $0x668] sm:$0xff]
        %v534 = vld [vmem:[%s213 + $0x670] sm:$0xff]
        %v535 = vld [vmem:[%s213 + $0x678] sm:$0xff]
        %v536 = vld [vmem:[%s213 + $0x680] sm:$0xff]
        %v537 = vld [vmem:[%s213 + $0x688] sm:$0xff]
        %v538 = vld [vmem:[%s213 + $0x690] sm:$0xff]
        %v539 = vld [vmem:[%s213 + $0x698] sm:$0xff]
        %v540 = vld [vmem:[%s213 + $0x6a0] sm:$0xff]
        %v541 = vld [vmem:[%s213 + $0x6a8] sm:$0xff]
        %v542 = vld [vmem:[%s213 + $0x6b0] sm:$0xff]
        %v543 = vld [vmem:[%s213 + $0x6b8] sm:$0xff]
        %v544 = vld [vmem:[%s213 + $0x6c0] sm:$0xff]
        %v545 = vld [vmem:[%s213 + $0x6c8] sm:$0xff]
        %v546 = vld [vmem:[%s213 + $0x6d0] sm:$0xff]
        %v547 = vld [vmem:[%s213 + $0x6d8] sm:$0xff]
        %v548 = vld [vmem:[%s213 + $0x6e0] sm:$0xff]
        %v549 = vld [vmem:[%s213 + $0x6e8] sm:$0xff]
        %v550 = vld [vmem:[%s213 + $0x6f0] sm:$0xff]
        %v551 = vld [vmem:[%s213 + $0x6f8] sm:$0xff]
        %v552 = vld [vmem:[%s213 + $0x700] sm:$0xff]
        %v553 = vld [vmem:[%s213 + $0x708] sm:$0xff]
        %v554 = vld [vmem:[%s213 + $0x710] sm:$0xff]
        %v555 = vld [vmem:[%s213 + $0x718] sm:$0xff]
        %v556 = vld [vmem:[%s213 + $0x720] sm:$0xff]
        %v557 = vld [vmem:[%s213 + $0x728] sm:$0xff]
        %v558 = vld [vmem:[%s213 + $0x730] sm:$0xff]
        %v559 = vld [vmem:[%s213 + $0x738] sm:$0xff]
        %v560 = vld [vmem:[%s213 + $0x740] sm:$0xff]
        %v561 = vld [vmem:[%s213 + $0x748] sm:$0xff]
        %v562 = vld [vmem:[%s213 + $0x750] sm:$0xff]
        %v563 = vld [vmem:[%s213 + $0x758] sm:$0xff]
        %v564 = vld [vmem:[%s213 + $0x760] sm:$0xff]
        %v565 = vld [vmem:[%s213 + $0x768] sm:$0xff]
        %v566 = vld [vmem:[%s213 + $0x770] sm:$0xff]
        %v567 = vld [vmem:[%s213 + $0x778] sm:$0xff]
        %v568 = vld [vmem:[%s213 + $0x780] sm:$0xff]
        %v569 = vld [vmem:[%s213 + $0x788] sm:$0xff]
        %v570 = vld [vmem:[%s213 + $0x790] sm:$0xff]
        %v571 = vld [vmem:[%s213 + $0x798] sm:$0xff]
        %v572 = vld [vmem:[%s213 + $0x7a0] sm:$0xff]
        %v573 = vld [vmem:[%s213 + $0x7a8] sm:$0xff]
        %v574 = vld [vmem:[%s213 + $0x7b0] sm:$0xff]
        %v575 = vld [vmem:[%s213 + $0x7b8] sm:$0xff]
        %v576 = vld [vmem:[%s213 + $0x7c0] sm:$0xff]
        %v577 = vld [vmem:[%s213 + $0x7c8] sm:$0xff]
        %v578 = vld [vmem:[%s213 + $0x7d0] sm:$0xff]
        %v579 = vld [vmem:[%s213 + $0x7d8] sm:$0xff]
        %v580 = vld [vmem:[%s213 + $0x7e0] sm:$0xff]
        %v581 = vld [vmem:[%s213 + $0x7e8] sm:$0xff]
        %v582 = vld [vmem:[%s213 + $0x7f0] sm:$0xff]
        %v583 = vld [vmem:[%s213 + $0x7f8] sm:$0xff]
        %v584 = vld [vmem:[%s213 + $0x800] sm:$0xff]
        %v585 = vld [vmem:[%s213 + $0x808] sm:$0xff]
        %v586 = vld [vmem:[%s213 + $0x810] sm:$0xff]
        %v587 = vld [vmem:[%s213 + $0x818] sm:$0xff]
        %v588 = vld [vmem:[%s213 + $0x820] sm:$0xff]
        %v589 = vld [vmem:[%s213 + $0x828] sm:$0xff]
        %v590 = vld [vmem:[%s213 + $0x830] sm:$0xff]
        %v591 = vld [vmem:[%s213 + $0x838] sm:$0xff]
        %v592 = vld [vmem:[%s213 + $0x840] sm:$0xff]
        %v593 = vld [vmem:[%s213 + $0x848] sm:$0xff]
        %v594 = vld [vmem:[%s213 + $0x850] sm:$0xff]
        %v595 = vld [vmem:[%s213 + $0x858] sm:$0xff]
        %v596 = vld [vmem:[%s213 + $0x860] sm:$0xff]
        %v597 = vld [vmem:[%s213 + $0x868] sm:$0xff]
        %v598 = vld [vmem:[%s213 + $0x870] sm:$0xff]
        %v599 = vld [vmem:[%s213 + $0x878] sm:$0xff]
        %v600 = vld [vmem:[%s213 + $0x880] sm:$0xff]
        %v601 = vld [vmem:[%s213 + $0x888] sm:$0xff]
        %v602 = vld [vmem:[%s213 + $0x890] sm:$0xff]
        %v603 = vld [vmem:[%s213 + $0x898] sm:$0xff]
        %v604 = vld [vmem:[%s213 + $0x8a0] sm:$0xff]
        %v605 = vld [vmem:[%s213 + $0x8a8] sm:$0xff]
        %v606 = vld [vmem:[%s213 + $0x8b0] sm:$0xff]
        %v607 = vld [vmem:[%s213 + $0x8b8] sm:$0xff]
        %v608 = vld [vmem:[%s213 + $0x8c0] sm:$0xff]
        %v609 = vld [vmem:[%s213 + $0x8c8] sm:$0xff]
        %v610 = vld [vmem:[%s213 + $0x8d0] sm:$0xff]
        %v611 = vld [vmem:[%s213 + $0x8d8] sm:$0xff]
        %v612 = vld [vmem:[%s213 + $0x8e0] sm:$0xff]
        %v613 = vld [vmem:[%s213 + $0x8e8] sm:$0xff]
        %v614 = vld [vmem:[%s213 + $0x8f0] sm:$0xff]
        %v615 = vld [vmem:[%s213 + $0x8f8] sm:$0xff]
        %v616 = vld [vmem:[%s213 + $0x900] sm:$0xff]
        %v617 = vld [vmem:[%s213 + $0x908] sm:$0xff]
        %v618 = vld [vmem:[%s213 + $0x910] sm:$0xff]
        %v619 = vld [vmem:[%s213 + $0x918] sm:$0xff]
        %v620 = vld [vmem:[%s213 + $0x920] sm:$0xff]
        %v621 = vld [vmem:[%s213 + $0x928] sm:$0xff]
        %v622 = vld [vmem:[%s213 + $0x930] sm:$0xff]
        %v623 = vld [vmem:[%s213 + $0x938] sm:$0xff]
        %v624 = vld [vmem:[%s213 + $0x940] sm:$0xff]
        %v625 = vld [vmem:[%s213 + $0x948] sm:$0xff]
        %v626 = vld [vmem:[%s213 + $0x950] sm:$0xff]
        %v627 = vld [vmem:[%s213 + $0x958] sm:$0xff]
        %v628 = vld [vmem:[%s213 + $0x960] sm:$0xff]
        %v629 = vld [vmem:[%s213 + $0x968] sm:$0xff]
        %v630 = vld [vmem:[%s213 + $0x970] sm:$0xff]
        %v631 = vld [vmem:[%s213 + $0x978] sm:$0xff]
        %v632 = vld [vmem:[%s213 + $0x980] sm:$0xff]
        %v633 = vld [vmem:[%s213 + $0x988] sm:$0xff]
        %v634 = vld [vmem:[%s213 + $0x990] sm:$0xff]
        %v635 = vld [vmem:[%s213 + $0x998] sm:$0xff]
        %v636 = vld [vmem:[%s213 + $0x9a0] sm:$0xff]
        %v637 = vld [vmem:[%s213 + $0x9a8] sm:$0xff]
        %v638 = vld [vmem:[%s213 + $0x9b0] sm:$0xff]
        %v639 = vld [vmem:[%s213 + $0x9b8] sm:$0xff]
        %v640 = vld [vmem:[%s213 + $0x9c0] sm:$0xff]
        %v641 = vld [vmem:[%s213 + $0x9c8] sm:$0xff]
        %v642 = vld [vmem:[%s213 + $0x9d0] sm:$0xff]
        %v643 = vld [vmem:[%s213 + $0x9d8] sm:$0xff]
        %v644 = vld [vmem:[%s213 + $0x9e0] sm:$0xff]
        %v645 = vld [vmem:[%s213 + $0x9e8] sm:$0xff]
        %v646 = vld [vmem:[%s213 + $0x9f0] sm:$0xff]
        %v647 = vld [vmem:[%s213 + $0x9f8] sm:$0xff]
        %v648 = vld [vmem:[%s213 + $0xa00] sm:$0xff]
        %v649 = vld [vmem:[%s213 + $0xa08] sm:$0xff]
        %v650 = vld [vmem:[%s213 + $0xa10] sm:$0xff]
        %v651 = vld [vmem:[%s213 + $0xa18] sm:$0xff]
        %v652 = vld [vmem:[%s213 + $0xa20] sm:$0xff]
        %v653 = vld [vmem:[%s213 + $0xa28] sm:$0xff]
        %v654 = vld [vmem:[%s213 + $0xa30] sm:$0xff]
        %v655 = vld [vmem:[%s213 + $0xa38] sm:$0xff]
        %v656 = vld [vmem:[%s213 + $0xa40] sm:$0xff]
        %v657 = vld [vmem:[%s213 + $0xa48] sm:$0xff]
        %v658 = vld [vmem:[%s213 + $0xa50] sm:$0xff]
        %v659 = vld [vmem:[%s213 + $0xa58] sm:$0xff]
        %v660 = vld [vmem:[%s213 + $0xa60] sm:$0xff]
        %v661 = vld [vmem:[%s213 + $0xa68] sm:$0xff]
        %v662 = vld [vmem:[%s213 + $0xa70] sm:$0xff]
        %v663 = vld [vmem:[%s213 + $0xa78] sm:$0xff]
        %v664 = vld [vmem:[%s213 + $0xa80] sm:$0xff]
        %v665 = vld [vmem:[%s213 + $0xa88] sm:$0xff]
        %v666 = vld [vmem:[%s213 + $0xa90] sm:$0xff]
        %v667 = vld [vmem:[%s213 + $0xa98] sm:$0xff]
        %v668 = vld [vmem:[%s213 + $0xaa0] sm:$0xff]
        %v669 = vld [vmem:[%s213 + $0xaa8] sm:$0xff]
        %v670 = vld [vmem:[%s213 + $0xab0] sm:$0xff]
        %v671 = vld [vmem:[%s213 + $0xab8] sm:$0xff]
        %v672 = vld [vmem:[%s213 + $0xac0] sm:$0xff]
        %v673 = vld [vmem:[%s213 + $0xac8] sm:$0xff]
        %v674 = vld [vmem:[%s213 + $0xad0] sm:$0xff]
        %v675 = vld [vmem:[%s213 + $0xad8] sm:$0xff]
        %v676 = vld [vmem:[%s213 + $0xae0] sm:$0xff]
        %v677 = vld [vmem:[%s213 + $0xae8] sm:$0xff]
        %v678 = vld [vmem:[%s213 + $0xaf0] sm:$0xff]
        %v679 = vld [vmem:[%s213 + $0xaf8] sm:$0xff]
        %680 = vmatpush.msra.mxu0 %v358
        %681 = vmatpush.msra.mxu0 %v356
        %682 = vmatpush.msra.mxu0 %v354
        %683 = vmatpush.msra.mxu0 %v352
        %684 = vmatpush.msra.mxu0 %v350
        %685 = vmatpush.msra.mxu0 %v348
        %686 = vmatpush.msra.mxu0 %v346
        %687 = vmatpush.msra.mxu0 %v344
        %688 = vmatpush.msra.mxu0 %v342
        %689 = vmatpush.msra.mxu0 %v340
        %690 = vmatpush.msra.mxu0 %v338
        %691 = vmatpush.msra.mxu0 %v336
        %692 = vmatpush.msra.mxu0 %v334
        %693 = vmatpush.msra.mxu0 %v332
        %694 = vmatpush.msra.mxu0 %v330
        %695 = vmatpush.msra.mxu0 %v328
        %696 = vmatmul.f32.gmra.mxu0 %v317
        %v697 = vpop.f32.mrf.mxu0
        %v698 = vadd.f32 0.0, %v697
        %699 = vdwg.mxu0
        %700 = vmatpush.msra.mxu0 %v390
        %701 = vmatpush.msra.mxu0 %v388
        %702 = vmatpush.msra.mxu0 %v386
        %703 = vmatpush.msra.mxu0 %v384
        %704 = vmatpush.msra.mxu0 %v382
        %705 = vmatpush.msra.mxu0 %v380
        %706 = vmatpush.msra.mxu0 %v378
        %707 = vmatpush.msra.mxu0 %v376
        %708 = vmatpush.msra.mxu0 %v374
        %709 = vmatpush.msra.mxu0 %v372
        %710 = vmatpush.msra.mxu0 %v370
        %711 = vmatpush.msra.mxu0 %v368
        %712 = vmatpush.msra.mxu0 %v366
        %713 = vmatpush.msra.mxu0 %v364
        %714 = vmatpush.msra.mxu0 %v362
        %715 = vmatpush.msra.mxu0 %v360
        %716 = vmatmul.f32.gmra.mxu0 %v318
        %v717 = vpop.f32.mrf.mxu0
        %v718 = vadd.f32 %v698, %v717
        %719 = vdwg.mxu0
        %720 = vmatpush.msra.mxu0 %v422
        %721 = vmatpush.msra.mxu0 %v420
        %722 = vmatpush.msra.mxu0 %v418
        %723 = vmatpush.msra.mxu0 %v416
        %724 = vmatpush.msra.mxu0 %v414
        %725 = vmatpush.msra.mxu0 %v412
        %726 = vmatpush.msra.mxu0 %v410
        %727 = vmatpush.msra.mxu0 %v408
        %728 = vmatpush.msra.mxu0 %v406
        %729 = vmatpush.msra.mxu0 %v404
        %730 = vmatpush.msra.mxu0 %v402
        %731 = vmatpush.msra.mxu0 %v400
        %732 = vmatpush.msra.mxu0 %v398
        %733 = vmatpush.msra.mxu0 %v396
        %734 = vmatpush.msra.mxu0 %v394
        %735 = vmatpush.msra.mxu0 %v392
        %736 = vmatmul.f32.gmra.mxu0 %v319
        %v737 = vpop.f32.mrf.mxu0
        %v738 = vadd.f32 %v718, %v737
        %739 = vdwg.mxu0
        %740 = vmatpush.msra.mxu0 %v454
        %741 = vmatpush.msra.mxu0 %v452
        %742 = vmatpush.msra.mxu0 %v450
        %743 = vmatpush.msra.mxu0 %v448
        %744 = vmatpush.msra.mxu0 %v446
        %745 = vmatpush.msra.mxu0 %v444
        %746 = vmatpush.msra.mxu0 %v442
        %747 = vmatpush.msra.mxu0 %v440
        %748 = vmatpush.msra.mxu0 %v438
        %749 = vmatpush.msra.mxu0 %v436
        %750 = vmatpush.msra.mxu0 %v434
        %751 = vmatpush.msra.mxu0 %v432
        %752 = vmatpush.msra.mxu0 %v430
        %753 = vmatpush.msra.mxu0 %v428
        %754 = vmatpush.msra.mxu0 %v426
        %755 = vmatpush.msra.mxu0 %v424
        %756 = vmatmul.f32.gmra.mxu0 %v320
        %v757 = vpop.f32.mrf.mxu0
        %v758 = vadd.f32 %v738, %v757
        %759 = vdwg.mxu0
        %760 = vmatpush.msra.mxu0 %v486
        %761 = vmatpush.msra.mxu0 %v484
        %762 = vmatpush.msra.mxu0 %v482
        %763 = vmatpush.msra.mxu0 %v480
        %764 = vmatpush.msra.mxu0 %v478
        %765 = vmatpush.msra.mxu0 %v476
        %766 = vmatpush.msra.mxu0 %v474
        %767 = vmatpush.msra.mxu0 %v472
        %768 = vmatpush.msra.mxu0 %v470
        %769 = vmatpush.msra.mxu0 %v468
        %770 = vmatpush.msra.mxu0 %v466
        %771 = vmatpush.msra.mxu0 %v464
        %772 = vmatpush.msra.mxu0 %v462
        %773 = vmatpush.msra.mxu0 %v460
        %774 = vmatpush.msra.mxu0 %v458
        %775 = vmatpush.msra.mxu0 %v456
        %776 = vmatmul.f32.gmra.mxu0 %v321
        %v777 = vpop.f32.mrf.mxu0
        %v778 = vadd.f32 %v758, %v777
        %779 = vdwg.mxu0
        %780 = vmatpush.msra.mxu0 %v518
        %781 = vmatpush.msra.mxu0 %v516
        %782 = vmatpush.msra.mxu0 %v514
        %783 = vmatpush.msra.mxu0 %v512
        %784 = vmatpush.msra.mxu0 %v510
        %785 = vmatpush.msra.mxu0 %v508
        %786 = vmatpush.msra.mxu0 %v506
        %787 = vmatpush.msra.mxu0 %v504
        %788 = vmatpush.msra.mxu0 %v502
        %789 = vmatpush.msra.mxu0 %v500
        %790 = vmatpush.msra.mxu0 %v498
        %791 = vmatpush.msra.mxu0 %v496
        %792 = vmatpush.msra.mxu0 %v494
        %793 = vmatpush.msra.mxu0 %v492
        %794 = vmatpush.msra.mxu0 %v490
        %795 = vmatpush.msra.mxu0 %v488
        %796 = vmatmul.f32.gmra.mxu0 %v322
        %v797 = vpop.f32.mrf.mxu0
        %v798 = vadd.f32 %v778, %v797
        %799 = vdwg.mxu0
        %800 = vmatpush.msra.mxu0 %v550
        %801 = vmatpush.msra.mxu0 %v548
        %802 = vmatpush.msra.mxu0 %v546
        %803 = vmatpush.msra.mxu0 %v544
        %804 = vmatpush.msra.mxu0 %v542
        %805 = vmatpush.msra.mxu0 %v540
        %806 = vmatpush.msra.mxu0 %v538
        %807 = vmatpush.msra.mxu0 %v536
        %808 = vmatpush.msra.mxu0 %v534
        %809 = vmatpush.msra.mxu0 %v532
        %810 = vmatpush.msra.mxu0 %v530
        %811 = vmatpush.msra.mxu0 %v528
        %812 = vmatpush.msra.mxu0 %v526
        %813 = vmatpush.msra.mxu0 %v524
        %814 = vmatpush.msra.mxu0 %v522
        %815 = vmatpush.msra.mxu0 %v520
        %816 = vmatmul.f32.gmra.mxu0 %v323
        %v817 = vpop.f32.mrf.mxu0
        %v818 = vadd.f32 %v798, %v817
        %819 = vdwg.mxu0
        %820 = vmatpush.msra.mxu0 %v582
        %821 = vmatpush.msra.mxu0 %v580
        %822 = vmatpush.msra.mxu0 %v578
        %823 = vmatpush.msra.mxu0 %v576
        %824 = vmatpush.msra.mxu0 %v574
        %825 = vmatpush.msra.mxu0 %v572
        %826 = vmatpush.msra.mxu0 %v570
        %827 = vmatpush.msra.mxu0 %v568
        %828 = vmatpush.msra.mxu0 %v566
        %829 = vmatpush.msra.mxu0 %v564
        %830 = vmatpush.msra.mxu0 %v562
        %831 = vmatpush.msra.mxu0 %v560
        %832 = vmatpush.msra.mxu0 %v558
        %833 = vmatpush.msra.mxu0 %v556
        %834 = vmatpush.msra.mxu0 %v554
        %835 = vmatpush.msra.mxu0 %v552
        %836 = vmatmul.f32.gmra.mxu0 %v324
        %v837 = vpop.f32.mrf.mxu0
        %v838 = vadd.f32 %v818, %v837
        %839 = vdwg.mxu0
        %840 = vmatpush.msra.mxu0 %v614
        %841 = vmatpush.msra.mxu0 %v612
        %842 = vmatpush.msra.mxu0 %v610
        %843 = vmatpush.msra.mxu0 %v608
        %844 = vmatpush.msra.mxu0 %v606
        %845 = vmatpush.msra.mxu0 %v604
        %846 = vmatpush.msra.mxu0 %v602
        %847 = vmatpush.msra.mxu0 %v600
        %848 = vmatpush.msra.mxu0 %v598
        %849 = vmatpush.msra.mxu0 %v596
        %850 = vmatpush.msra.mxu0 %v594
        %851 = vmatpush.msra.mxu0 %v592
        %852 = vmatpush.msra.mxu0 %v590
        %853 = vmatpush.msra.mxu0 %v588
        %854 = vmatpush.msra.mxu0 %v586
        %855 = vmatpush.msra.mxu0 %v584
        %856 = vmatmul.f32.gmra.mxu0 %v325
        %v857 = vpop.f32.mrf.mxu0
        %v858 = vadd.f32 %v838, %v857
        %859 = vdwg.mxu0
        %860 = vmatpush.msra.mxu0 %v646
        %861 = vmatpush.msra.mxu0 %v644
        %862 = vmatpush.msra.mxu0 %v642
        %863 = vmatpush.msra.mxu0 %v640
        %864 = vmatpush.msra.mxu0 %v638
        %865 = vmatpush.msra.mxu0 %v636
        %866 = vmatpush.msra.mxu0 %v634
        %867 = vmatpush.msra.mxu0 %v632
        %868 = vmatpush.msra.mxu0 %v630
        %869 = vmatpush.msra.mxu0 %v628
        %870 = vmatpush.msra.mxu0 %v626
        %871 = vmatpush.msra.mxu0 %v624
        %872 = vmatpush.msra.mxu0 %v622
        %873 = vmatpush.msra.mxu0 %v620
        %874 = vmatpush.msra.mxu0 %v618
        %875 = vmatpush.msra.mxu0 %v616
        %876 = vmatmul.f32.gmra.mxu0 %v326
        %v877 = vpop.f32.mrf.mxu0
        %v878 = vadd.f32 %v858, %v877
        %879 = vdwg.mxu0
        %880 = vmatpush.msra.mxu0 %v678
        %881 = vmatpush.msra.mxu0 %v676
        %882 = vmatpush.msra.mxu0 %v674
        %883 = vmatpush.msra.mxu0 %v672
        %884 = vmatpush.msra.mxu0 %v670
        %885 = vmatpush.msra.mxu0 %v668
        %886 = vmatpush.msra.mxu0 %v666
        %887 = vmatpush.msra.mxu0 %v664
        %888 = vmatpush.msra.mxu0 %v662
        %889 = vmatpush.msra.mxu0 %v660
        %890 = vmatpush.msra.mxu0 %v658
        %891 = vmatpush.msra.mxu0 %v656
        %892 = vmatpush.msra.mxu0 %v654
        %893 = vmatpush.msra.mxu0 %v652
        %894 = vmatpush.msra.mxu0 %v650
        %895 = vmatpush.msra.mxu0 %v648
        %896 = vmatmul.f32.gmra.mxu0 %v327
        %v897 = vpop.f32.mrf.mxu0
        %v898 = vadd.f32 %v878, %v897
        %899 = vdwg.mxu0
        %900 = vmatpush.msra.mxu0 %v359
        %901 = vmatpush.msra.mxu0 %v357
        %902 = vmatpush.msra.mxu0 %v355
        %903 = vmatpush.msra.mxu0 %v353
        %904 = vmatpush.msra.mxu0 %v351
        %905 = vmatpush.msra.mxu0 %v349
        %906 = vmatpush.msra.mxu0 %v347
        %907 = vmatpush.msra.mxu0 %v345
        %908 = vmatpush.msra.mxu0 %v343
        %909 = vmatpush.msra.mxu0 %v341
        %910 = vmatpush.msra.mxu0 %v339
        %911 = vmatpush.msra.mxu0 %v337
        %912 = vmatpush.msra.mxu0 %v335
        %913 = vmatpush.msra.mxu0 %v333
        %914 = vmatpush.msra.mxu0 %v331
        %915 = vmatpush.msra.mxu0 %v329
        %916 = vmatmul.f32.gmra.mxu0 %v317
        %v917 = vpop.f32.mrf.mxu0
        %v918 = vadd.f32 0.0, %v917
        %919 = vdwg.mxu0
        %920 = vmatpush.msra.mxu0 %v391
        %921 = vmatpush.msra.mxu0 %v389
        %922 = vmatpush.msra.mxu0 %v387
        %923 = vmatpush.msra.mxu0 %v385
        %924 = vmatpush.msra.mxu0 %v383
        %925 = vmatpush.msra.mxu0 %v381
        %926 = vmatpush.msra.mxu0 %v379
        %927 = vmatpush.msra.mxu0 %v377
        %928 = vmatpush.msra.mxu0 %v375
        %929 = vmatpush.msra.mxu0 %v373
        %930 = vmatpush.msra.mxu0 %v371
        %931 = vmatpush.msra.mxu0 %v369
        %932 = vmatpush.msra.mxu0 %v367
        %933 = vmatpush.msra.mxu0 %v365
        %934 = vmatpush.msra.mxu0 %v363
        %935 = vmatpush.msra.mxu0 %v361
        %936 = vmatmul.f32.gmra.mxu0 %v318
        %v937 = vpop.f32.mrf.mxu0
        %v938 = vadd.f32 %v918, %v937
        %939 = vdwg.mxu0
        %940 = vmatpush.msra.mxu0 %v423
        %941 = vmatpush.msra.mxu0 %v421
        %942 = vmatpush.msra.mxu0 %v419
        %943 = vmatpush.msra.mxu0 %v417
        %944 = vmatpush.msra.mxu0 %v415
        %945 = vmatpush.msra.mxu0 %v413
        %946 = vmatpush.msra.mxu0 %v411
        %947 = vmatpush.msra.mxu0 %v409
        %948 = vmatpush.msra.mxu0 %v407
        %949 = vmatpush.msra.mxu0 %v405
        %950 = vmatpush.msra.mxu0 %v403
        %951 = vmatpush.msra.mxu0 %v401
        %952 = vmatpush.msra.mxu0 %v399
        %953 = vmatpush.msra.mxu0 %v397
        %954 = vmatpush.msra.mxu0 %v395
        %955 = vmatpush.msra.mxu0 %v393
        %956 = vmatmul.f32.gmra.mxu0 %v319
        %v957 = vpop.f32.mrf.mxu0
        %v958 = vadd.f32 %v938, %v957
        %959 = vdwg.mxu0
        %960 = vmatpush.msra.mxu0 %v455
        %961 = vmatpush.msra.mxu0 %v453
        %962 = vmatpush.msra.mxu0 %v451
        %963 = vmatpush.msra.mxu0 %v449
        %964 = vmatpush.msra.mxu0 %v447
        %965 = vmatpush.msra.mxu0 %v445
        %966 = vmatpush.msra.mxu0 %v443
        %967 = vmatpush.msra.mxu0 %v441
        %968 = vmatpush.msra.mxu0 %v439
        %969 = vmatpush.msra.mxu0 %v437
        %970 = vmatpush.msra.mxu0 %v435
        %971 = vmatpush.msra.mxu0 %v433
        %972 = vmatpush.msra.mxu0 %v431
        %973 = vmatpush.msra.mxu0 %v429
        %974 = vmatpush.msra.mxu0 %v427
        %975 = vmatpush.msra.mxu0 %v425
        %976 = vmatmul.f32.gmra.mxu0 %v320
        %v977 = vpop.f32.mrf.mxu0
        %v978 = vadd.f32 %v958, %v977
        %979 = vdwg.mxu0
        %980 = vmatpush.msra.mxu0 %v487
        %981 = vmatpush.msra.mxu0 %v485
        %982 = vmatpush.msra.mxu0 %v483
        %983 = vmatpush.msra.mxu0 %v481
        %984 = vmatpush.msra.mxu0 %v479
        %985 = vmatpush.msra.mxu0 %v477
        %986 = vmatpush.msra.mxu0 %v475
        %987 = vmatpush.msra.mxu0 %v473
        %988 = vmatpush.msra.mxu0 %v471
        %989 = vmatpush.msra.mxu0 %v469
        %990 = vmatpush.msra.mxu0 %v467
        %991 = vmatpush.msra.mxu0 %v465
        %992 = vmatpush.msra.mxu0 %v463
        %993 = vmatpush.msra.mxu0 %v461
        %994 = vmatpush.msra.mxu0 %v459
        %995 = vmatpush.msra.mxu0 %v457
        %996 = vmatmul.f32.gmra.mxu0 %v321
        %v997 = vpop.f32.mrf.mxu0
        %v998 = vadd.f32 %v978, %v997
        %999 = vdwg.mxu0
        %1000 = vmatpush.msra.mxu0 %v519
        %1001 = vmatpush.msra.mxu0 %v517
        %1002 = vmatpush.msra.mxu0 %v515
        %1003 = vmatpush.msra.mxu0 %v513
        %1004 = vmatpush.msra.mxu0 %v511
        %1005 = vmatpush.msra.mxu0 %v509
        %1006 = vmatpush.msra.mxu0 %v507
        %1007 = vmatpush.msra.mxu0 %v505
        %1008 = vmatpush.msra.mxu0 %v503
        %1009 = vmatpush.msra.mxu0 %v501
        %1010 = vmatpush.msra.mxu0 %v499
        %1011 = vmatpush.msra.mxu0 %v497
        %1012 = vmatpush.msra.mxu0 %v495
        %1013 = vmatpush.msra.mxu0 %v493
        %1014 = vmatpush.msra.mxu0 %v491
        %1015 = vmatpush.msra.mxu0 %v489
        %1016 = vmatmul.f32.gmra.mxu0 %v322
        %v1017 = vpop.f32.mrf.mxu0
        %v1018 = vadd.f32 %v998, %v1017
        %1019 = vdwg.mxu0
        %1020 = vmatpush.msra.mxu0 %v551
        %1021 = vmatpush.msra.mxu0 %v549
        %1022 = vmatpush.msra.mxu0 %v547
        %1023 = vmatpush.msra.mxu0 %v545
        %1024 = vmatpush.msra.mxu0 %v543
        %1025 = vmatpush.msra.mxu0 %v541
        %1026 = vmatpush.msra.mxu0 %v539
        %1027 = vmatpush.msra.mxu0 %v537
        %1028 = vmatpush.msra.mxu0 %v535
        %1029 = vmatpush.msra.mxu0 %v533
        %1030 = vmatpush.msra.mxu0 %v531
        %1031 = vmatpush.msra.mxu0 %v529
        %1032 = vmatpush.msra.mxu0 %v527
        %1033 = vmatpush.msra.mxu0 %v525
        %1034 = vmatpush.msra.mxu0 %v523
        %1035 = vmatpush.msra.mxu0 %v521
        %1036 = vmatmul.f32.gmra.mxu0 %v323
        %v1037 = vpop.f32.mrf.mxu0
        %v1038 = vadd.f32 %v1018, %v1037
        %1039 = vdwg.mxu0
        %1040 = vmatpush.msra.mxu0 %v583
        %1041 = vmatpush.msra.mxu0 %v581
        %1042 = vmatpush.msra.mxu0 %v579
        %1043 = vmatpush.msra.mxu0 %v577
        %1044 = vmatpush.msra.mxu0 %v575
        %1045 = vmatpush.msra.mxu0 %v573
        %1046 = vmatpush.msra.mxu0 %v571
        %1047 = vmatpush.msra.mxu0 %v569
        %1048 = vmatpush.msra.mxu0 %v567
        %1049 = vmatpush.msra.mxu0 %v565
        %1050 = vmatpush.msra.mxu0 %v563
        %1051 = vmatpush.msra.mxu0 %v561
        %1052 = vmatpush.msra.mxu0 %v559
        %1053 = vmatpush.msra.mxu0 %v557
        %1054 = vmatpush.msra.mxu0 %v555
        %1055 = vmatpush.msra.mxu0 %v553
        %1056 = vmatmul.f32.gmra.mxu0 %v324
        %v1057 = vpop.f32.mrf.mxu0
        %v1058 = vadd.f32 %v1038, %v1057
        %1059 = vdwg.mxu0
        %1060 = vmatpush.msra.mxu0 %v615
        %1061 = vmatpush.msra.mxu0 %v613
        %1062 = vmatpush.msra.mxu0 %v611
        %1063 = vmatpush.msra.mxu0 %v609
        %1064 = vmatpush.msra.mxu0 %v607
        %1065 = vmatpush.msra.mxu0 %v605
        %1066 = vmatpush.msra.mxu0 %v603
        %1067 = vmatpush.msra.mxu0 %v601
        %1068 = vmatpush.msra.mxu0 %v599
        %1069 = vmatpush.msra.mxu0 %v597
        %1070 = vmatpush.msra.mxu0 %v595
        %1071 = vmatpush.msra.mxu0 %v593
        %1072 = vmatpush.msra.mxu0 %v591
        %1073 = vmatpush.msra.mxu0 %v589
        %1074 = vmatpush.msra.mxu0 %v587
        %1075 = vmatpush.msra.mxu0 %v585
        %1076 = vmatmul.f32.gmra.mxu0 %v325
        %v1077 = vpop.f32.mrf.mxu0
        %v1078 = vadd.f32 %v1058, %v1077
        %1079 = vdwg.mxu0
        %1080 = vmatpush.msra.mxu0 %v647
        %1081 = vmatpush.msra.mxu0 %v645
        %1082 = vmatpush.msra.mxu0 %v643
        %1083 = vmatpush.msra.mxu0 %v641
        %1084 = vmatpush.msra.mxu0 %v639
        %1085 = vmatpush.msra.mxu0 %v637
        %1086 = vmatpush.msra.mxu0 %v635
        %1087 = vmatpush.msra.mxu0 %v633
        %1088 = vmatpush.msra.mxu0 %v631
        %1089 = vmatpush.msra.mxu0 %v629
        %1090 = vmatpush.msra.mxu0 %v627
        %1091 = vmatpush.msra.mxu0 %v625
        %1092 = vmatpush.msra.mxu0 %v623
        %1093 = vmatpush.msra.mxu0 %v621
        %1094 = vmatpush.msra.mxu0 %v619
        %1095 = vmatpush.msra.mxu0 %v617
        %1096 = vmatmul.f32.gmra.mxu0 %v326
        %v1097 = vpop.f32.mrf.mxu0
        %v1098 = vadd.f32 %v1078, %v1097
        %1099 = vdwg.mxu0
        %1100 = vmatpush.msra.mxu0 %v679
        %1101 = vmatpush.msra.mxu0 %v677
        %1102 = vmatpush.msra.mxu0 %v675
        %1103 = vmatpush.msra.mxu0 %v673
        %1104 = vmatpush.msra.mxu0 %v671
        %1105 = vmatpush.msra.mxu0 %v669
        %1106 = vmatpush.msra.mxu0 %v667
        %1107 = vmatpush.msra.mxu0 %v665
        %1108 = vmatpush.msra.mxu0 %v663
        %1109 = vmatpush.msra.mxu0 %v661
        %1110 = vmatpush.msra.mxu0 %v659
        %1111 = vmatpush.msra.mxu0 %v657
        %1112 = vmatpush.msra.mxu0 %v655
        %1113 = vmatpush.msra.mxu0 %v653
        %1114 = vmatpush.msra.mxu0 %v651
        %1115 = vmatpush.msra.mxu0 %v649
        %1116 = vmatmul.f32.gmra.mxu0 %v327
        %v1117 = vpop.f32.mrf.mxu0
        %v1118 = vadd.f32 %v1098, %v1117
        %1119 = vdwg.mxu0
        %v1120 = vmul.f32 %v898, 1.4285715
        %v1121 = vmul.f32 %v1118, 1.4285715
        %v1122 = vld [vmem:[%s223] sm:$0x3]
        %v1124 = vperm.slane %v1122, 0
        %v1125 = vperm.slane %v1122, 1
        %v1128 = vadd.f32 %v1120, %v1124
        %v1129 = vadd.f32 %v1121, %v1125
        %1130 = vst [vmem:[%s260] sm:$0xff] %v1128
        %1131 = vst [vmem:[%s260 + $0x8] sm:$0xff] %v1129
        %s1132 = smul.u32 2, %s21
        %p1133 = scmp.lt.s32.totalorder %s1132, 7
        %s1134 = scalar_select %p1133, %s1132, 7
        %s1135 = smul.addr %s1134, 8
        %s1136 = scalar_lea.vmem %s4, %s1135
        // Predicated region
        $region45: #{dropout_linear.1} parent=35 // pred_check
          %p1137 = pneg %p133
        $region46: #{dropout_linear.1} parent=35 // pred_check_branch
          %1139 = sbr.rel (%p1137) target = $region48
        $region47: #{dropout_linear.1} parent=35 // pred_region
          %s1140 = smul.u32 2, %s21
        $region48: #{dropout_linear.1} parent=35 // pred_fallthru
          _
      $region36: #{dropout_linear.1} parent=5 // pred_fallthru
        _
      %p1141 = scmp.le.s32.totalorder 2, %s16
      // Predicated region
      $region49: #{dropout_linear.1} parent=5 // pred_check
        %p1142 = pneg %p1141
      $region50: #{dropout_linear.1} parent=5 // pred_check_branch
        %1144 = sbr.rel (%p1142) target = $region52
      $region51: #{dropout_linear.1} parent=5 // pred_region
        %s1145 = ssub.s32 %s16, 2
        // Predicated region
        $region53: #{dropout_linear.1} parent=51 // pred_check
          %p1146 = pneg %p139
        $region54: #{dropout_linear.1} parent=51 // pred_check_branch
          %1148 = sbr.rel (%p1146) target = $region56
        $region55: #{dropout_linear.1} parent=51 // pred_region
          %s1149 = smul.u32 2, %s22
          %p1150 = scmp.lt.s32.totalorder %s1149, 7
          %s1151 = scalar_select %p1150, %s1149, 7
          %s1152 = smul.addr %s1151, 8
          %s1153 = scalar_lea.vmem %s4, %s1152
        $region56: #{dropout_linear.1} parent=51 // pred_fallthru
          _
      $region52: #{dropout_linear.1} parent=5 // pred_fallthru
        _
    $region6: #{dropout_linear.1} parent=1 // loop_footer
      %s20 = sadd.s32 1, %s16
    $region7: #{dropout_linear.1} parent=1 // loop_footer_branch
      %15 = sbr.rel target = $region3
    $region8: #{dropout_linear.1} parent=1 // loop_exit
      _
    %1154 = vsyncpa [#allocation3], 1
    %s1155 = scalar_lea.sflag [#allocation3], 1
    %1156 = vsyncpa %s1155, 1
    %1157 = vsyncpa [#allocation5], 1
    %s1158 = scalar_lea.sflag [#allocation5], 1
    %1159 = vsyncpa %s1158, 1

</llo_original>
